<compile_context>
chip_gen: v7x
topology: tpu7x:2x2x1
jax: 0.10.0
libtpu: 0.0.40
codegen_flags: <defaults>
</compile_context>

<pallas_src>
import math
import numpy as np
import jax
import jax.numpy as jnp
from jax.experimental import pallas as pl
from jax.experimental.pallas import tpu as pltpu


def _round_up(x: int, m: int) -> int:
    return ((x + m - 1) // m) * m


def _mste_kernel(t_ref, fexp_ref, offs_ref, out_ref):
    # t_ref:    (tile_rows, G)   packed time values
    # fexp_ref: (G, W)           expand+frequency matrix, W = G * embed_dim
    # offs_ref: (1, W)           per-column phase offset (shift*freq + pi/2 for cos cols)
    # out_ref:  (tile_rows, W)   lane-dense output block
    t = t_ref[...]
    offs = offs_ref[...]
    if t.shape[1] == 1:
        # G == 1 (embed_dim >= 128): plain VPU broadcast multiply.
        phase = t * fexp_ref[...]
    else:
        # Lane-expand + frequency multiply in one small MXU matmul (MXU is idle
        # otherwise in this kernel).  HIGHEST precision keeps f32 accuracy.
        phase = jnp.dot(t, fexp_ref[...],
                        precision=jax.lax.Precision.HIGHEST,
                        preferred_element_type=jnp.float32)
    out_ref[...] = jnp.sin(phase + offs).astype(out_ref.dtype)


class MultiScaleTimeEncoderPallas:
    def __init__(self, embed_dim: int, num_scales: int = 4, scale_factors=None,
                 base: float = 10000.0, out_dtype=jnp.float32):
        assert embed_dim % num_scales == 0
        self.embed_dim = embed_dim
        self.num_scales = num_scales
        if scale_factors is None:
            scale_factors = [1.0, 1.0 / 5, 1.0 / 21, 1.0 / 63]
        assert len(scale_factors) == num_scales
        sub_dim = embed_dim // num_scales
        assert sub_dim % 2 == 0, "sub embedding dim must be even"
        num_freq = sub_dim // 2
        # Downstream that tolerates it can pass out_dtype=jnp.bfloat16 to halve
        # HBM write traffic (kernel is write-bandwidth bound); compute stays f32.
        self.out_dtype = out_dtype

        # Deterministic parameter init, exactly as in the PyTorch __init__:
        inv_freq = 1.0 / base ** (np.arange(0, num_freq, dtype=np.float32) / num_freq)
        self.frequencies = np.stack([inv_freq for _ in range(num_scales)], axis=0)  # (S, F)
        self.time_shifts = np.zeros((num_scales,), dtype=np.float32)  # trainable for i>0, init 0
        self.scale_factors = np.asarray(scale_factors, dtype=np.float32)

        # Fold into per-output-column effective frequency / phase-offset.
        # cos(x) == sin(x + pi/2) -> cos columns just get an extra pi/2 offset.
        eff_freq = np.zeros((embed_dim,), dtype=np.float32)
        eff_offs = np.zeros((embed_dim,), dtype=np.float32)
        for i in range(num_scales):
            c0 = i * sub_dim
            f = self.frequencies[i]
            eff_freq[c0:c0 + num_freq] = self.scale_factors[i] * f
            eff_freq[c0 + num_freq:c0 + sub_dim] = self.scale_factors[i] * f
            eff_offs[c0:c0 + num_freq] = self.time_shifts[i] * f
            eff_offs[c0 + num_freq:c0 + sub_dim] = self.time_shifts[i] * f + np.float32(math.pi / 2)

        # Lane-packing: pack G time values per output row so the stored lane
        # width W = G*D is >= 128 (full, unmasked lane stores).
        D = embed_dim
        G = max(1, 128 // D) if D < 128 else 1
        W = G * D
        self.group = G
        self.lane_width = W

        # Expand+frequency matrix: fexp[g, g*D + c] = eff_freq[c], zeros elsewhere,
        # so (t @ fexp)[r, g*D + c] = t[r, g] * eff_freq[c].
        fexp = np.zeros((G, W), dtype=np.float32)
        offs_w = np.zeros((W,), dtype=np.float32)
        for g in range(G):
            fexp[g, g * D:(g + 1) * D] = eff_freq
            offs_w[g * D:(g + 1) * D] = eff_offs
        self.fexp = jnp.asarray(fexp)            # (G, W)
        self.offs_w = jnp.asarray(offs_w)[None]  # (1, W)

    def __call__(self, t: jnp.ndarray) -> jnp.ndarray:
        orig_shape = t.shape
        D, G, W = self.embed_dim, self.group, self.lane_width

        t_flat = jnp.ravel(t).astype(jnp.float32)
        n = t_flat.shape[0]
        rows = -(-n // G)  # ceil(n / G) packed rows

        # Row tile: big enough to amortize the ~0.35us/step pipeline overhead,
        # capped so 2x double-buffered (tile_rows, W) f32 output blocks stay
        # well under the scoped VMEM limit on every generation (v5e 16 MiB,
        # v6e/v7x 32 MiB scoped; v7x 64 MiB physical).
        max_rows_by_vmem = max(8, (8 * 1024 * 1024) // (W * 4 * 2))
        target_rows = min(2048, _round_up(max_rows_by_vmem, 8))
        if rows <= target_rows:
            tile_rows = _round_up(max(rows, 1), 8)
            rows_pad = tile_rows
        else:
            tile_rows = target_rows
            rows_pad = _round_up(rows, tile_rows)

        n_pad = rows_pad * G
        if n_pad != n:
            t_flat = jnp.pad(t_flat, (0, n_pad - n))
        t_packed = t_flat.reshape(rows_pad, G)

        grid = (rows_pad // tile_rows,)

        out = pl.pallas_call(
            _mste_kernel,
            out_shape=jax.ShapeDtypeStruct((rows_pad, W), self.out_dtype),
            grid_spec=pltpu.PrefetchScalarGridSpec(
                num_scalar_prefetch=0,
                grid=grid,
                in_specs=[
                    pl.BlockSpec((tile_rows, G), lambda i: (i, 0)),
                    pl.BlockSpec((G, W), lambda i: (0, 0)),
                    pl.BlockSpec((1, W), lambda i: (0, 0)),
                ],
                out_specs=pl.BlockSpec((tile_rows, W), lambda i: (i, 0)),
            ),
            compiler_params=pltpu.CompilerParams(
                dimension_semantics=("parallel",)),
        )(t_packed, self.fexp, self.offs_w)

        # (rows_pad, W) is a pure row-major view of (n_pad, D): free reshape.
        out = out.reshape(n_pad, D)[:n]
        return out.reshape(*orig_shape, D)

    # Pure-JAX reference mirroring the PyTorch forward, for verification.
    def reference(self, t: jnp.ndarray) -> jnp.ndarray:
        outs = []
        for i in range(self.num_scales):
            tt = t.astype(jnp.float32) * self.scale_factors[i] + self.time_shifts[i]
            phase = tt[..., None] * jnp.asarray(self.frequencies[i])  # (..., F)
            outs.append(jnp.concatenate([jnp.sin(phase), jnp.cos(phase)], axis=-1))
        return jnp.concatenate(outs, axis=-1)


if __name__ == "__main__":
    key = jax.random.PRNGKey(0)
    B, S = 2, 8
    embed_dim = 32                      # divisible by num_scales=4, sub dim even
    t = jax.random.uniform(key, (B, S), dtype=jnp.float32) * 100.0

    enc = MultiScaleTimeEncoderPallas(embed_dim=embed_dim)
    out = enc(t)
    out = jax.block_until_ready(out)

    ref = enc.reference(t)
    assert out.shape == (B, S, embed_dim), out.shape
    # Tolerance note: the kernel folds scale*freq and cos(x)=sin(x+pi/2) and uses
    # an f32 MXU expand (HIGHEST precision); with |phase| up to ~100 the f32
    # reassociation differences are up to a few e-6..e-5 absolute.
    np.testing.assert_allclose(np.asarray(out), np.asarray(ref), rtol=1e-5, atol=5e-5)
    print("KERNEL_OK")
</pallas_src>

<mosaic_0001>
module attributes {stable_mosaic.version = 11 : i64} {
  func.func @_mste_kernel(%arg0: i32, %arg1: memref<8x4xf32, #tpu.memory_space<vmem>>, %arg2: memref<4x128xf32, #tpu.memory_space<vmem>>, %arg3: memref<1x128xf32, #tpu.memory_space<vmem>>, %arg4: memref<8x128xf32, #tpu.memory_space<vmem>>) attributes {dimension_semantics = [#tpu.dimension_semantics<parallel>], iteration_bounds = array<i64: 1>, scalar_prefetch = 0 : i64, scratch_operands = 0 : i64, tpu.core_type = #tpu.core_type<tc>, window_params = [{transform_indices = @transform_0, window_bounds = array<i64: 8, 4>}, {pipeline_mode = #tpu.pipeline_mode<synchronous>, transform_indices = @transform_1, window_bounds = array<i64: 4, 128>}, {pipeline_mode = #tpu.pipeline_mode<synchronous>, transform_indices = @transform_2, window_bounds = array<i64: 1, 128>}, {transform_indices = @transform_3, window_bounds = array<i64: 8, 128>}]} {
    %c0 = arith.constant 0 : index
    %c0_0 = arith.constant 0 : index
    %0 = vector.load %arg1[%c0, %c0_0] : memref<8x4xf32, #tpu.memory_space<vmem>>, vector<8x4xf32>
    %c0_1 = arith.constant 0 : index
    %c0_2 = arith.constant 0 : index
    %1 = vector.load %arg3[%c0_1, %c0_2] : memref<1x128xf32, #tpu.memory_space<vmem>>, vector<1x128xf32>
    %c0_3 = arith.constant 0 : index
    %c0_4 = arith.constant 0 : index
    %2 = vector.load %arg2[%c0_3, %c0_4] : memref<4x128xf32, #tpu.memory_space<vmem>>, vector<4x128xf32>
    %cst = arith.constant dense<0.000000e+00> : vector<8x128xf32>
    %3 = tpu.matmul %0, %2, %cst {dimension_numbers = #tpu.dot_dimension_numbers<[1], [0], [0], [1], [0, 0, 1, 1], [], []>, precision = #tpu.contract_precision<fp32>} : vector<8x4xf32>, vector<4x128xf32>, vector<8x128xf32> -> vector<8x128xf32>
    %4 = vector.broadcast %1 : vector<1x128xf32> to vector<8x128xf32>
    %5 = arith.addf %3, %4 : vector<8x128xf32>
    %6 = math.sin %5 : vector<8x128xf32>
    %c0_5 = arith.constant 0 : index
    %c0_6 = arith.constant 0 : index
    %7 = vector.load %arg4[%c0_5, %c0_6] : memref<8x128xf32, #tpu.memory_space<vmem>>, vector<8x128xf32>
    tpu.vector_store %arg4[%c0_5, %c0_6], %6 {strides = array<i32>} : memref<8x128xf32, #tpu.memory_space<vmem>>, vector<8x128xf32>,
    return
  }
  func.func @transform_0(%arg0: i32) -> (i32, i32) {
    %c0_i32 = arith.constant 0 : i32
    %c0_i32_0 = arith.constant 0 : i32
    return %arg0, %c0_i32 : i32, i32
  }
  func.func @transform_1(%arg0: i32) -> (i32, i32) {
    %c0_i32 = arith.constant 0 : i32
    %c0_i32_0 = arith.constant 0 : i32
    %c0_i32_1 = arith.constant 0 : i32
    return %c0_i32, %c0_i32_0 : i32, i32
  }
  func.func @transform_2(%arg0: i32) -> (i32, i32) {
    %c0_i32 = arith.constant 0 : i32
    %c0_i32_0 = arith.constant 0 : i32
    %c0_i32_1 = arith.constant 0 : i32
    return %c0_i32, %c0_i32_0 : i32, i32
  }
  func.func @transform_3(%arg0: i32) -> (i32, i32) {
    %c0_i32 = arith.constant 0 : i32
    %c0_i32_0 = arith.constant 0 : i32
    return %arg0, %c0_i32 : i32, i32
  }
}

</mosaic_0001>

<llo_original>
// kernel: tpu_custom_call.1
$region0: #{tpu_custom_call.1}
  #allocation0 [shape = 'u32[]', space=smem, size = 0x4, offset = 0x4, fixed_abs, tag = 'smem constant byte address 0x4 - core index']
  #allocation1 [shape = 'u32[144,128]{1,0:T(1,128)}', space=vmem, size = 0x12000, scoped, tag = 'internal scratch']
  %s0 = inlined_call_operand.vmem [shape: f32[8,4], index: 0, kind: input, shape index: {}]
  %s1 = inlined_call_operand.vmem [shape: f32[4,128], index: 1, kind: input, shape index: {}]
  %s2 = inlined_call_operand.vmem [shape: f32[1,128], index: 2, kind: input, shape index: {}]
  %s3 = inlined_call_operand.hbm [shape: f32[8,128], index: 3, kind: output, shape index: {}]
  %s4 = sld [smem:[#allocation0]]
  $region22: #{tpu_custom_call.1} parent=0
    _
  %s6 = ssub.s32 1, %s4
  %s7 = scalar_select 0, %s6, %s4
  $region1: #{tpu_custom_call.1} parent=0
    #allocation2 [shape = 'u8[4096]{0}', space=vmem, size = 0x1000, scoped, tag = 'output window, operand 0, single buffered']
    #allocation3 [shape = 's32[1]{0}', space=sflag, size = 0x4, scoped, tag = 'scoped memory for tpu_custom_call.1']
    %8 = vsyncpa [#allocation3], 0
    // Predicated region
    $region2: #{tpu_custom_call.1} parent=1 // pred_check
      _
    $region3: #{tpu_custom_call.1} parent=1 // pred_check_branch
      %10 = sbr.rel (0) target = $region5
    $region4: #{tpu_custom_call.1} parent=1 // pred_region
      _
    $region5: #{tpu_custom_call.1} parent=1 // pred_fallthru
      _
    // Predicated region
    $region6: #{tpu_custom_call.1} parent=1 // pred_check
      _
    $region7: #{tpu_custom_call.1} parent=1 // pred_check_branch
      %12 = sbr.rel (0) target = $region9
    $region8: #{tpu_custom_call.1} parent=1 // pred_region
      _
    $region9: #{tpu_custom_call.1} parent=1 // pred_fallthru
      _
    // Predicated region
    $region10: #{tpu_custom_call.1} parent=1 // pred_check
      _
    $region11: #{tpu_custom_call.1} parent=1 // pred_check_branch
      %14 = sbr.rel (0) target = $region13
    $region12: #{tpu_custom_call.1} parent=1 // pred_region
      _
    $region13: #{tpu_custom_call.1} parent=1 // pred_fallthru
      _
    %v15 = vld [vmem:[%s0] sm:$0xff]
    %v16 = vld [vmem:[%s2] sm:$0x1]
    %v17 = vld [vmem:[%s1] sm:$0xf]
    %v19 = vlaneseq
    %v20 = vshrl.u32 %v19, 7
    %v21 = vsub.s32 0, %v20
    %v22 = vrot.slane %v16, %v21
    %vm24 = vcmask 31744
    %v26 = vsel %vm24, %v15, 0
    %vm28 = vcmask 1043456
    %v30 = vsel %vm28, %v17, 0
    %32 = vmatprep.subr.mxu0 0.0
    %v33 = vand.u32 %v30, 4294901760
    %34 = vmatpush1.msra.mxu0 %v33
    %35 = vmatprep.subr.mxu0 0.0
    %36 = vmatpush1.msra.mxu0 0.0
    %37 = vmatprep.subr.mxu0 0.0
    %38 = vmatpush1.msra.mxu0 0.0
    %39 = vmatprep.subr.mxu0 0.0
    %40 = vmatpush1.msra.mxu0 0.0
    %41 = vmatprep.subr.mxu0 0.0
    %42 = vmatpush1.msra.mxu0 0.0
    %43 = vmatprep.subr.mxu0 0.0
    %44 = vmatpush1.msra.mxu0 0.0
    %45 = vmatprep.subr.mxu0 0.0
    %46 = vmatpush1.msra.mxu0 0.0
    %47 = vmatprep.subr.mxu0 0.0
    %48 = vmatpush1.msra.mxu0 0.0
    %49 = vmatprep.subr.mxu0 0.0
    %50 = vmatpush1.msra.mxu0 0.0
    %51 = vmatprep.subr.mxu0 0.0
    %52 = vmatpush1.msra.mxu0 0.0
    %53 = vmatprep.subr.mxu0 0.0
    %54 = vmatpush1.msra.mxu0 0.0
    %55 = vmatprep.subr.mxu0 0.0
    %56 = vmatpush1.msra.mxu0 0.0
    %57 = vmatprep.subr.mxu0 0.0
    %58 = vmatpush1.msra.mxu0 0.0
    %59 = vmatprep.subr.mxu0 0.0
    %60 = vmatpush1.msra.mxu0 0.0
    %61 = vmatprep.subr.mxu0 0.0
    %62 = vmatpush1.msra.mxu0 0.0
    %63 = vmatprep.subr.mxu0 0.0
    %64 = vmatpush1.msra.mxu0 0.0
    %65 = vmatprep.subr.mxu0 0.0
    %66 = vmatpush1.msra.mxu0 0.0
    %67 = vmatprep.subr.mxu0 0.0
    %68 = vmatpush1.msra.mxu0 0.0
    %69 = vmatprep.subr.mxu0 0.0
    %70 = vmatpush1.msra.mxu0 0.0
    %71 = vmatprep.subr.mxu0 0.0
    %72 = vmatpush1.msra.mxu0 0.0
    %73 = vmatprep.subr.mxu0 0.0
    %74 = vmatpush1.msra.mxu0 0.0
    %75 = vmatprep.subr.mxu0 0.0
    %76 = vmatpush1.msra.mxu0 0.0
    %77 = vmatprep.subr.mxu0 0.0
    %78 = vmatpush1.msra.mxu0 0.0
    %79 = vmatprep.subr.mxu0 0.0
    %80 = vmatpush1.msra.mxu0 0.0
    %81 = vmatprep.subr.mxu0 0.0
    %82 = vmatpush1.msra.mxu0 0.0
    %83 = vmatprep.subr.mxu0 0.0
    %84 = vmatpush1.msra.mxu0 0.0
    %85 = vmatprep.subr.mxu0 0.0
    %86 = vmatpush1.msra.mxu0 0.0
    %87 = vmatprep.subr.mxu0 0.0
    %88 = vmatpush1.msra.mxu0 0.0
    %89 = vmatprep.subr.mxu0 0.0
    %90 = vmatpush1.msra.mxu0 0.0
    %91 = vmatprep.subr.mxu0 0.0
    %92 = vmatpush1.msra.mxu0 0.0
    %93 = vmatprep.subr.mxu0 0.0
    %94 = vmatpush1.msra.mxu0 0.0
    %95 = vmatprep.subr.mxu0 0.0
    %96 = vmatpush1.msra.mxu0 0.0
    %97 = vmatprep.mubr.f32.mxu0 0.0
    %v98 = vand.u32 %v26, 4294901760
    %v99 = vsub.f32 %v26, %v98
    %v100 = vand.u32 %v99, 4294901760
    %v101 = vsub.f32 %v99, %v100
    %v102 = vand.u32 %v101, 4294901760
    %103 = vmatmul.mubr.f32.gmra.mrb[0].mxu0 %v102
    %v104 = vpop.f32.mrb[0].mxu0
    %v105 = vadd.f32 %v22, %v104
    %v106 = vpop.f32.mrb[0].mxu0
    %107 = vdwg.mxu0
    %108 = vmatprep.subr.mxu0 0.0
    %v109 = vand.u32 %v30, 4294901760
    %v110 = vsub.f32 %v30, %v109
    %v111 = vand.u32 %v110, 4294901760
    %v112 = vsub.f32 %v110, %v111
    %v113 = vand.u32 %v112, 4294901760
    %114 = vmatpush1.msra.mxu0 %v113
    %115 = vmatprep.subr.mxu0 0.0
    %116 = vmatpush1.msra.mxu0 0.0
    %117 = vmatprep.subr.mxu0 0.0
    %118 = vmatpush1.msra.mxu0 0.0
    %119 = vmatprep.subr.mxu0 0.0
    %120 = vmatpush1.msra.mxu0 0.0
    %121 = vmatprep.subr.mxu0 0.0
    %122 = vmatpush1.msra.mxu0 0.0
    %123 = vmatprep.subr.mxu0 0.0
    %124 = vmatpush1.msra.mxu0 0.0
    %125 = vmatprep.subr.mxu0 0.0
    %126 = vmatpush1.msra.mxu0 0.0
    %127 = vmatprep.subr.mxu0 0.0
    %128 = vmatpush1.msra.mxu0 0.0
    %129 = vmatprep.subr.mxu0 0.0
    %130 = vmatpush1.msra.mxu0 0.0
    %131 = vmatprep.subr.mxu0 0.0
    %132 = vmatpush1.msra.mxu0 0.0
    %133 = vmatprep.subr.mxu0 0.0
    %134 = vmatpush1.msra.mxu0 0.0
    %135 = vmatprep.subr.mxu0 0.0
    %136 = vmatpush1.msra.mxu0 0.0
    %137 = vmatprep.subr.mxu0 0.0
    %138 = vmatpush1.msra.mxu0 0.0
    %139 = vmatprep.subr.mxu0 0.0
    %140 = vmatpush1.msra.mxu0 0.0
    %141 = vmatprep.subr.mxu0 0.0
    %142 = vmatpush1.msra.mxu0 0.0
    %143 = vmatprep.subr.mxu0 0.0
    %144 = vmatpush1.msra.mxu0 0.0
    %145 = vmatprep.subr.mxu0 0.0
    %146 = vmatpush1.msra.mxu0 0.0
    %147 = vmatprep.subr.mxu0 0.0
    %148 = vmatpush1.msra.mxu0 0.0
    %149 = vmatprep.subr.mxu0 0.0
    %150 = vmatpush1.msra.mxu0 0.0
    %151 = vmatprep.subr.mxu0 0.0
    %152 = vmatpush1.msra.mxu0 0.0
    %153 = vmatprep.subr.mxu0 0.0
    %154 = vmatpush1.msra.mxu0 0.0
    %155 = vmatprep.subr.mxu0 0.0
    %156 = vmatpush1.msra.mxu0 0.0
    %157 = vmatprep.subr.mxu0 0.0
    %158 = vmatpush1.msra.mxu0 0.0
    %159 = vmatprep.subr.mxu0 0.0
    %160 = vmatpush1.msra.mxu0 0.0
    %161 = vmatprep.subr.mxu0 0.0
    %162 = vmatpush1.msra.mxu0 0.0
    %163 = vmatprep.subr.mxu0 0.0
    %164 = vmatpush1.msra.mxu0 0.0
    %165 = vmatprep.subr.mxu0 0.0
    %166 = vmatpush1.msra.mxu0 0.0
    %167 = vmatprep.subr.mxu0 0.0
    %168 = vmatpush1.msra.mxu0 0.0
    %169 = vmatprep.subr.mxu0 0.0
    %170 = vmatpush1.msra.mxu0 0.0
    %171 = vmatprep.subr.mxu0 0.0
    %172 = vmatpush1.msra.mxu0 0.0
    %173 = vmatprep.subr.mxu0 0.0
    %174 = vmatpush1.msra.mxu0 0.0
    %175 = vmatprep.subr.mxu0 0.0
    %176 = vmatpush1.msra.mxu0 0.0
    %177 = vmatprep.mubr.f32.mxu0 0.0
    %v178 = vand.u32 %v26, 4294901760
    %179 = vmatmul.mubr.f32.gmra.mrb[0].mxu0 %v178
    %v180 = vpop.f32.mrb[0].mxu0
    %v181 = vadd.f32 %v105, %v180
    %v182 = vpop.f32.mrb[0].mxu0
    %183 = vdwg.mxu0
    %184 = vmatprep.subr.mxu0 0.0
    %v185 = vand.u32 %v30, 4294901760
    %v186 = vsub.f32 %v30, %v185
    %187 = vmatpush1.msra.mxu0 %v186
    %188 = vmatprep.subr.mxu0 0.0
    %189 = vmatpush1.msra.mxu0 0.0
    %190 = vmatprep.subr.mxu0 0.0
    %191 = vmatpush1.msra.mxu0 0.0
    %192 = vmatprep.subr.mxu0 0.0
    %193 = vmatpush1.msra.mxu0 0.0
    %194 = vmatprep.subr.mxu0 0.0
    %195 = vmatpush1.msra.mxu0 0.0
    %196 = vmatprep.subr.mxu0 0.0
    %197 = vmatpush1.msra.mxu0 0.0
    %198 = vmatprep.subr.mxu0 0.0
    %199 = vmatpush1.msra.mxu0 0.0
    %200 = vmatprep.subr.mxu0 0.0
    %201 = vmatpush1.msra.mxu0 0.0
    %202 = vmatprep.subr.mxu0 0.0
    %203 = vmatpush1.msra.mxu0 0.0
    %204 = vmatprep.subr.mxu0 0.0
    %205 = vmatpush1.msra.mxu0 0.0
    %206 = vmatprep.subr.mxu0 0.0
    %207 = vmatpush1.msra.mxu0 0.0
    %208 = vmatprep.subr.mxu0 0.0
    %209 = vmatpush1.msra.mxu0 0.0
    %210 = vmatprep.subr.mxu0 0.0
    %211 = vmatpush1.msra.mxu0 0.0
    %212 = vmatprep.subr.mxu0 0.0
    %213 = vmatpush1.msra.mxu0 0.0
    %214 = vmatprep.subr.mxu0 0.0
    %215 = vmatpush1.msra.mxu0 0.0
    %216 = vmatprep.subr.mxu0 0.0
    %217 = vmatpush1.msra.mxu0 0.0
    %218 = vmatprep.subr.mxu0 0.0
    %219 = vmatpush1.msra.mxu0 0.0
    %220 = vmatprep.subr.mxu0 0.0
    %221 = vmatpush1.msra.mxu0 0.0
    %222 = vmatprep.subr.mxu0 0.0
    %223 = vmatpush1.msra.mxu0 0.0
    %224 = vmatprep.subr.mxu0 0.0
    %225 = vmatpush1.msra.mxu0 0.0
    %226 = vmatprep.subr.mxu0 0.0
    %227 = vmatpush1.msra.mxu0 0.0
    %228 = vmatprep.subr.mxu0 0.0
    %229 = vmatpush1.msra.mxu0 0.0
    %230 = vmatprep.subr.mxu0 0.0
    %231 = vmatpush1.msra.mxu0 0.0
    %232 = vmatprep.subr.mxu0 0.0
    %233 = vmatpush1.msra.mxu0 0.0
    %234 = vmatprep.subr.mxu0 0.0
    %235 = vmatpush1.msra.mxu0 0.0
    %236 = vmatprep.subr.mxu0 0.0
    %237 = vmatpush1.msra.mxu0 0.0
    %238 = vmatprep.subr.mxu0 0.0
    %239 = vmatpush1.msra.mxu0 0.0
    %240 = vmatprep.subr.mxu0 0.0
    %241 = vmatpush1.msra.mxu0 0.0
    %242 = vmatprep.subr.mxu0 0.0
    %243 = vmatpush1.msra.mxu0 0.0
    %244 = vmatprep.subr.mxu0 0.0
    %245 = vmatpush1.msra.mxu0 0.0
    %246 = vmatprep.subr.mxu0 0.0
    %247 = vmatpush1.msra.mxu0 0.0
    %248 = vmatprep.subr.mxu0 0.0
    %249 = vmatpush1.msra.mxu0 0.0
    %250 = vmatprep.mubr.f32.mxu0 0.0
    %v251 = vand.u32 %v26, 4294901760
    %v252 = vsub.f32 %v26, %v251
    %253 = vmatmul.mubr.f32.gmra.mrb[0].mxu0 %v252
    %v254 = vpop.f32.mrb[0].mxu0
    %v255 = vadd.f32 %v181, %v254
    %v256 = vpop.f32.mrb[0].mxu0
    %257 = vdwg.mxu0
    %258 = vmatprep.subr.mxu0 0.0
    %v259 = vand.u32 %v30, 4294901760
    %260 = vmatpush1.msra.mxu0 %v259
    %261 = vmatprep.subr.mxu0 0.0
    %262 = vmatpush1.msra.mxu0 0.0
    %263 = vmatprep.subr.mxu0 0.0
    %264 = vmatpush1.msra.mxu0 0.0
    %265 = vmatprep.subr.mxu0 0.0
    %266 = vmatpush1.msra.mxu0 0.0
    %267 = vmatprep.subr.mxu0 0.0
    %268 = vmatpush1.msra.mxu0 0.0
    %269 = vmatprep.subr.mxu0 0.0
    %270 = vmatpush1.msra.mxu0 0.0
    %271 = vmatprep.subr.mxu0 0.0
    %272 = vmatpush1.msra.mxu0 0.0
    %273 = vmatprep.subr.mxu0 0.0
    %274 = vmatpush1.msra.mxu0 0.0
    %275 = vmatprep.subr.mxu0 0.0
    %276 = vmatpush1.msra.mxu0 0.0
    %277 = vmatprep.subr.mxu0 0.0
    %278 = vmatpush1.msra.mxu0 0.0
    %279 = vmatprep.subr.mxu0 0.0
    %280 = vmatpush1.msra.mxu0 0.0
    %281 = vmatprep.subr.mxu0 0.0
    %282 = vmatpush1.msra.mxu0 0.0
    %283 = vmatprep.subr.mxu0 0.0
    %284 = vmatpush1.msra.mxu0 0.0
    %285 = vmatprep.subr.mxu0 0.0
    %286 = vmatpush1.msra.mxu0 0.0
    %287 = vmatprep.subr.mxu0 0.0
    %288 = vmatpush1.msra.mxu0 0.0
    %289 = vmatprep.subr.mxu0 0.0
    %290 = vmatpush1.msra.mxu0 0.0
    %291 = vmatprep.subr.mxu0 0.0
    %292 = vmatpush1.msra.mxu0 0.0
    %293 = vmatprep.subr.mxu0 0.0
    %294 = vmatpush1.msra.mxu0 0.0
    %295 = vmatprep.subr.mxu0 0.0
    %296 = vmatpush1.msra.mxu0 0.0
    %297 = vmatprep.subr.mxu0 0.0
    %298 = vmatpush1.msra.mxu0 0.0
    %299 = vmatprep.subr.mxu0 0.0
    %300 = vmatpush1.msra.mxu0 0.0
    %301 = vmatprep.subr.mxu0 0.0
    %302 = vmatpush1.msra.mxu0 0.0
    %303 = vmatprep.subr.mxu0 0.0
    %304 = vmatpush1.msra.mxu0 0.0
    %305 = vmatprep.subr.mxu0 0.0
    %306 = vmatpush1.msra.mxu0 0.0
    %307 = vmatprep.subr.mxu0 0.0
    %308 = vmatpush1.msra.mxu0 0.0
    %309 = vmatprep.subr.mxu0 0.0
    %310 = vmatpush1.msra.mxu0 0.0
    %311 = vmatprep.subr.mxu0 0.0
    %312 = vmatpush1.msra.mxu0 0.0
    %313 = vmatprep.subr.mxu0 0.0
    %314 = vmatpush1.msra.mxu0 0.0
    %315 = vmatprep.subr.mxu0 0.0
    %316 = vmatpush1.msra.mxu0 0.0
    %317 = vmatprep.subr.mxu0 0.0
    %318 = vmatpush1.msra.mxu0 0.0
    %319 = vmatprep.subr.mxu0 0.0
    %320 = vmatpush1.msra.mxu0 0.0
    %321 = vmatprep.subr.mxu0 0.0
    %322 = vmatpush1.msra.mxu0 0.0
    %323 = vmatprep.mubr.f32.mxu0 0.0
    %v324 = vand.u32 %v26, 4294901760
    %v325 = vsub.f32 %v26, %v324
    %v326 = vand.u32 %v325, 4294901760
    %327 = vmatmul.mubr.f32.gmra.mrb[0].mxu0 %v326
    %v328 = vpop.f32.mrb[0].mxu0
    %v329 = vadd.f32 %v255, %v328
    %v330 = vpop.f32.mrb[0].mxu0
    %331 = vdwg.mxu0
    %332 = vmatprep.subr.mxu0 0.0
    %v333 = vand.u32 %v30, 4294901760
    %v334 = vsub.f32 %v30, %v333
    %v335 = vand.u32 %v334, 4294901760
    %336 = vmatpush1.msra.mxu0 %v335
    %337 = vmatprep.subr.mxu0 0.0
    %338 = vmatpush1.msra.mxu0 0.0
    %339 = vmatprep.subr.mxu0 0.0
    %340 = vmatpush1.msra.mxu0 0.0
    %341 = vmatprep.subr.mxu0 0.0
    %342 = vmatpush1.msra.mxu0 0.0
    %343 = vmatprep.subr.mxu0 0.0
    %344 = vmatpush1.msra.mxu0 0.0
    %345 = vmatprep.subr.mxu0 0.0
    %346 = vmatpush1.msra.mxu0 0.0
    %347 = vmatprep.subr.mxu0 0.0
    %348 = vmatpush1.msra.mxu0 0.0
    %349 = vmatprep.subr.mxu0 0.0
    %350 = vmatpush1.msra.mxu0 0.0
    %351 = vmatprep.subr.mxu0 0.0
    %352 = vmatpush1.msra.mxu0 0.0
    %353 = vmatprep.subr.mxu0 0.0
    %354 = vmatpush1.msra.mxu0 0.0
    %355 = vmatprep.subr.mxu0 0.0
    %356 = vmatpush1.msra.mxu0 0.0
    %357 = vmatprep.subr.mxu0 0.0
    %358 = vmatpush1.msra.mxu0 0.0
    %359 = vmatprep.subr.mxu0 0.0
    %360 = vmatpush1.msra.mxu0 0.0
    %361 = vmatprep.subr.mxu0 0.0
    %362 = vmatpush1.msra.mxu0 0.0
    %363 = vmatprep.subr.mxu0 0.0
    %364 = vmatpush1.msra.mxu0 0.0
    %365 = vmatprep.subr.mxu0 0.0
    %366 = vmatpush1.msra.mxu0 0.0
    %367 = vmatprep.subr.mxu0 0.0
    %368 = vmatpush1.msra.mxu0 0.0
    %369 = vmatprep.subr.mxu0 0.0
    %370 = vmatpush1.msra.mxu0 0.0
    %371 = vmatprep.subr.mxu0 0.0
    %372 = vmatpush1.msra.mxu0 0.0
    %373 = vmatprep.subr.mxu0 0.0
    %374 = vmatpush1.msra.mxu0 0.0
    %375 = vmatprep.subr.mxu0 0.0
    %376 = vmatpush1.msra.mxu0 0.0
    %377 = vmatprep.subr.mxu0 0.0
    %378 = vmatpush1.msra.mxu0 0.0
    %379 = vmatprep.subr.mxu0 0.0
    %380 = vmatpush1.msra.mxu0 0.0
    %381 = vmatprep.subr.mxu0 0.0
    %382 = vmatpush1.msra.mxu0 0.0
    %383 = vmatprep.subr.mxu0 0.0
    %384 = vmatpush1.msra.mxu0 0.0
    %385 = vmatprep.subr.mxu0 0.0
    %386 = vmatpush1.msra.mxu0 0.0
    %387 = vmatprep.subr.mxu0 0.0
    %388 = vmatpush1.msra.mxu0 0.0
    %389 = vmatprep.subr.mxu0 0.0
    %390 = vmatpush1.msra.mxu0 0.0
    %391 = vmatprep.subr.mxu0 0.0
    %392 = vmatpush1.msra.mxu0 0.0
    %393 = vmatprep.subr.mxu0 0.0
    %394 = vmatpush1.msra.mxu0 0.0
    %395 = vmatprep.subr.mxu0 0.0
    %396 = vmatpush1.msra.mxu0 0.0
    %397 = vmatprep.subr.mxu0 0.0
    %398 = vmatpush1.msra.mxu0 0.0
    %399 = vmatprep.mubr.f32.mxu0 0.0
    %v400 = vand.u32 %v26, 4294901760
    %401 = vmatmul.mubr.f32.gmra.mrb[0].mxu0 %v400
    %v402 = vpop.f32.mrb[0].mxu0
    %v403 = vadd.f32 %v329, %v402
    %v404 = vpop.f32.mrb[0].mxu0
    %405 = vdwg.mxu0
    %406 = vmatprep.subr.mxu0 0.0
    %v407 = vand.u32 %v30, 4294901760
    %408 = vmatpush1.msra.mxu0 %v407
    %409 = vmatprep.subr.mxu0 0.0
    %410 = vmatpush1.msra.mxu0 0.0
    %411 = vmatprep.subr.mxu0 0.0
    %412 = vmatpush1.msra.mxu0 0.0
    %413 = vmatprep.subr.mxu0 0.0
    %414 = vmatpush1.msra.mxu0 0.0
    %415 = vmatprep.subr.mxu0 0.0
    %416 = vmatpush1.msra.mxu0 0.0
    %417 = vmatprep.subr.mxu0 0.0
    %418 = vmatpush1.msra.mxu0 0.0
    %419 = vmatprep.subr.mxu0 0.0
    %420 = vmatpush1.msra.mxu0 0.0
    %421 = vmatprep.subr.mxu0 0.0
    %422 = vmatpush1.msra.mxu0 0.0
    %423 = vmatprep.subr.mxu0 0.0
    %424 = vmatpush1.msra.mxu0 0.0
    %425 = vmatprep.subr.mxu0 0.0
    %426 = vmatpush1.msra.mxu0 0.0
    %427 = vmatprep.subr.mxu0 0.0
    %428 = vmatpush1.msra.mxu0 0.0
    %429 = vmatprep.subr.mxu0 0.0
    %430 = vmatpush1.msra.mxu0 0.0
    %431 = vmatprep.subr.mxu0 0.0
    %432 = vmatpush1.msra.mxu0 0.0
    %433 = vmatprep.subr.mxu0 0.0
    %434 = vmatpush1.msra.mxu0 0.0
    %435 = vmatprep.subr.mxu0 0.0
    %436 = vmatpush1.msra.mxu0 0.0
    %437 = vmatprep.subr.mxu0 0.0
    %438 = vmatpush1.msra.mxu0 0.0
    %439 = vmatprep.subr.mxu0 0.0
    %440 = vmatpush1.msra.mxu0 0.0
    %441 = vmatprep.subr.mxu0 0.0
    %442 = vmatpush1.msra.mxu0 0.0
    %443 = vmatprep.subr.mxu0 0.0
    %444 = vmatpush1.msra.mxu0 0.0
    %445 = vmatprep.subr.mxu0 0.0
    %446 = vmatpush1.msra.mxu0 0.0
    %447 = vmatprep.subr.mxu0 0.0
    %448 = vmatpush1.msra.mxu0 0.0
    %449 = vmatprep.subr.mxu0 0.0
    %450 = vmatpush1.msra.mxu0 0.0
    %451 = vmatprep.subr.mxu0 0.0
    %452 = vmatpush1.msra.mxu0 0.0
    %453 = vmatprep.subr.mxu0 0.0
    %454 = vmatpush1.msra.mxu0 0.0
    %455 = vmatprep.subr.mxu0 0.0
    %456 = vmatpush1.msra.mxu0 0.0
    %457 = vmatprep.subr.mxu0 0.0
    %458 = vmatpush1.msra.mxu0 0.0
    %459 = vmatprep.subr.mxu0 0.0
    %460 = vmatpush1.msra.mxu0 0.0
    %461 = vmatprep.subr.mxu0 0.0
    %462 = vmatpush1.msra.mxu0 0.0
    %463 = vmatprep.subr.mxu0 0.0
    %464 = vmatpush1.msra.mxu0 0.0
    %465 = vmatprep.subr.mxu0 0.0
    %466 = vmatpush1.msra.mxu0 0.0
    %467 = vmatprep.subr.mxu0 0.0
    %468 = vmatpush1.msra.mxu0 0.0
    %469 = vmatprep.subr.mxu0 0.0
    %470 = vmatpush1.msra.mxu0 0.0
    %471 = vmatprep.mubr.f32.mxu0 0.0
    %v472 = vand.u32 %v26, 4294901760
    %473 = vmatmul.mubr.f32.gmra.mrb[0].mxu0 %v472
    %v474 = vpop.f32.mrb[0].mxu0
    %v475 = vadd.f32 %v403, %v474
    %v476 = vpop.f32.mrb[0].mxu0
    %477 = vdwg.mxu0
    %v478 = vand.u32 2147483647, %v475
    %vm479 = vcmp.le.f32.partialorder %v478, 0.7853982
    %vm480 = vcmp.lt.s32.totalorder %v475, 0
    %v481 = vand.u32 %v475, 2139095040
    %v482 = vshrl.u32 %v481, 23
    %v483 = vsub.s32 %v482, 127
    %v484 = vand.u32 2147483647, %v475
    %v485 = vand.u32 %v484, 8388607
    %v486 = vor.u32 %v485, 8388608
    %v487 = vsub.s32 0, %v486
    %v488 = vadd.s32 %v483, 1
    %vm489 = vcmp.gt.s32.totalorder %v488, 0
    %v490 = vsel %vm489, %v488, 0
    %v491 = vshrl.u32 %v490, 5
    %v492 = vand.u32 %v490, 31
    %v493 = vsub.s32 32, %v492
    %v494 = vshrl.u32 683565275, %v493
    %v495 = vshll.u32 683565275, %v492
    %v496 = vshrl.u32 2475754826, %v493
    %v497 = vor.u32 %v495, %v496
    %v498 = vshll.u32 2475754826, %v492
    %v499 = vshrl.u32 2131351028, %v493
    %v500 = vor.u32 %v498, %v499
    %v501 = vshll.u32 2131351028, %v492
    %v502 = vshrl.u32 2102212464, %v493
    %v503 = vor.u32 %v501, %v502
    %v504 = vshll.u32 2102212464, %v492
    %v505 = vshrl.u32 920167782, %v493
    %v506 = vor.u32 %v504, %v505
    %v507 = vshll.u32 920167782, %v492
    %v508 = vshrl.u32 1326507024, %v493
    %v509 = vor.u32 %v507, %v508
    %vm510 = vcmp.lt.s32.totalorder %v491, 1
    %vm511 = vcmp.lt.s32.totalorder %v491, 2
    %vm512 = vcmp.lt.s32.totalorder %v491, 3
    %vm513 = vcmp.lt.s32.totalorder %v491, 4
    %v514 = vsel %vm510, %v494, %v497
    %v515 = vsel %vm513, %v503, 2102212464
    %v516 = vsel %vm512, %v500, %v515
    %v517 = vsel %vm511, %v514, %v516
    %v518 = vsel %vm510, %v497, %v500
    %v519 = vsel %vm513, %v506, 920167782
    %v520 = vsel %vm512, %v503, %v519
    %v521 = vsel %vm511, %v518, %v520
    %v522 = vsel %vm510, %v500, %v503
    %v523 = vsel %vm513, %v509, 1326507024
    %v524 = vsel %vm512, %v506, %v523
    %v525 = vsel %vm511, %v522, %v524
    %v526 = vshll.u32 %v486, 8
    %v527 = vmul.u32.u64.compose %v526, %v525
    %v528 = vextract.low.u32 %v527
    %v529 = vextract.high.u32 %v527
    %v530 = vmul.u32.u64.compose %v526, %v521
    %v531 = vextract.low.u32 %v530
    %v532 = vextract.high.u32 %v530
    %v533 = vmul.u32 %v526, %v517
    %v534 = vadd.s32 %v529, %v531
    %vm535 = vc.u32 %v529, %v531
    %v536 = vadd.s32 %v532, 1
    %v537 = vsel %vm535, %v536, %v532
    %v538 = vadd.s32 %v533, %v537
    %v539 = vadd.s32 %v538, 536870912
    %v540 = vshrl.u32 %v539, 30
    %v541 = vshll.u32 %v540, 30
    %v542 = vsub.s32 %v538, %v541
    %vm543 = vcmp.lt.s32.totalorder %v542, 0
    %v544 = vsub.s32 0, %v542
    %v545 = vsel %vm543, %v544, %v542
    %v546 = vclz %v545
    %v547 = vsub.s32 %v546, 2
    %vm548 = vcmp.gt.s32.totalorder 0, %v547
    %v549 = vsel %vm548, 0, %v547
    %v550 = vsub.s32 32, %v549
    %v551 = vshll.u32 %v542, %v549
    %v552 = vshrl.u32 %v534, %v550
    %v553 = vor.u32 %v551, %v552
    %v554 = vsub.s32 4294967266, %v549
    %v555 = vadd.s32 %v554, 127
    %v556 = vshll.u32 %v555, 23
    %v557 = vor.u32 4788187, %v556
    %v558 = vand.u32 2147483647, %v557
    %v560 = vcvt.s32.f32 %v553
    %v561 = vmul.f32 %v560, %v558
    %v562 = vxor.u32 %v561, 2147483648
    %v563 = vsel %vm480, %v562, %v561
    %v564 = vsub.s32 4, %v540
    %v565 = vsel %vm480, %v564, %v540
    %v566 = vsel %vm479, %v475, %v563
    %v567 = vsel %vm479, 0, %v565
    %v568 = vcosq.f32.pop %v566
    %v569 = vsinq.f32.pop %v566
    %vm570 = vweird.f32 %v475
    %v571 = vadd.s32 %v567, 3
    %v572 = vand.u32 %v571, 3
    %vm573 = vcmp.lt.s32.totalorder %v572, 2
    %vm574 = vcmp.eq.s32.totalorder %v572, 0
    %v575 = vxor.u32 %v569, 2147483648
    %v576 = vsel %vm574, %v568, %v575
    %vm577 = vcmp.eq.s32.totalorder %v572, 2
    %v578 = vxor.u32 %v568, 2147483648
    %v579 = vsel %vm577, %v578, %v569
    %v580 = vsel %vm573, %v576, %v579
    %v581 = vsel %vm570, nan, %v580
    %582 = vst [vmem:[#allocation2] sm:$0xff] %v581
    // Predicated region
    $region14: #{tpu_custom_call.1} parent=1 // pred_check
      _
    $region15: #{tpu_custom_call.1} parent=1 // pred_check_branch
      %584 = sbr.rel (0) target = $region17
    $region16: #{tpu_custom_call.1} parent=1 // pred_region
      %s586 = ssub.s32 128, 128
      %587 = vsyncadd [#allocation3], %s586
      %s589 = sshll.u32 [#allocation2], 4
      %s590 = int_to_ptr.vmem [resolvable:$true] %s589
      %592 = dma.vmem_to_hbm [thread:$0]  %s590, 128, %s3, [#allocation3]
    $region17: #{tpu_custom_call.1} parent=1 // pred_fallthru
      _
    // Predicated region
    $region18: #{tpu_custom_call.1} parent=1 // pred_check
      _
    $region19: #{tpu_custom_call.1} parent=1 // pred_check_branch
      %594 = sbr.rel (0) target = $region21
    $region20: #{tpu_custom_call.1} parent=1 // pred_region
      %595 = dma.done [#allocation3], 128
    $region21: #{tpu_custom_call.1} parent=1 // pred_fallthru
      _
    %596 = vsyncpa [#allocation3], 1

</llo_original>
